<compile_context>
chip_gen: v7x
topology: tpu7x:2x2x1
jax: 0.10.0
libtpu: 0.0.40
codegen_flags: <defaults>
</compile_context>

<pallas_src>
import functools

import jax
import jax.numpy as jnp
from jax.experimental import pallas as pl
from jax.experimental.pallas import tpu as pltpu


def _round_up(x, m):
    return (x + m - 1) // m * m


def _vmem_capacity_bytes():
    """Physical VMEM per core (128 MiB v5e/v6e, 64 MiB v7x); safe fallback."""
    try:
        cap = getattr(pltpu.get_tpu_info(), "vmem_capacity_bytes", None)
        if cap:
            return int(cap)
    except Exception:
        pass
    return 64 * 1024 * 1024


def _gathered_mlp_kernel(idx_ref, feats_ref, w1_ref, b1_ref, w2_ref, b2_ref,
                         o_ref, x_buf, sems, *, batch, n_tiles, padded_tail,
                         compute_dtype):
    """One grid step = one batch tile, with the NEXT tile's gather prefetched.

    idx_ref  : (B_pad,) int32 SMEM (scalar prefetch)       gather indices
    feats_ref: (N, F_pad) feature table — HBM (pl.ANY) or resident VMEM block
    w1_ref   : (F_pad, H_pad) VMEM, resident (constant index_map)
    b1_ref   : (1, H_pad)     VMEM
    w2_ref   : (H_pad, H_pad) VMEM, resident
    b2_ref   : (1, H_pad)     VMEM
    o_ref    : (TB, H_pad)    VMEM output tile (lane-dense)
    x_buf    : (S, TB, F_pad) VMEM gather slots (S = 2 when n_tiles > 1)
    sems     : (S, TB)        DMA semaphores, one per gathered row per slot
    """
    num_slots, tb, _ = x_buf.shape
    i = pl.program_id(0)
    slot = (i % num_slots) if num_slots > 1 else 0
    next_slot = (1 - slot) if num_slots > 1 else 0

    def row_copy(j, base, s, do_wait):
        # Wait descriptors are rebuilt with the SAME row index that was issued.
        row = idx_ref[base + j]
        cp = pltpu.make_async_copy(
            feats_ref.at[pl.ds(row, 1), :],
            x_buf.at[s, pl.ds(j, 1), :],
            sems.at[s, j],
        )
        if do_wait:
            cp.wait()
        else:
            cp.start()

    def gather(tile, s, do_wait):
        # TODO(synk): coalesce to one semaphore per slot + unrolled issue loop
        # to cut the 2*tb scalar iterations / descriptor rebuilds per tile.
        base = tile * tb

        @pl.loop(0, tb)
        def _(j):
            if padded_tail:
                @pl.when(base + j < batch)   # skip DMAs for padded tail rows
                def _():
                    row_copy(j, base, s, do_wait)
            else:
                row_copy(j, base, s, do_wait)

    if n_tiles == 1:
        # Single tile: nothing to pipeline across steps.
        gather(0, 0, do_wait=False)
    else:
        # Prime: the first grid step issues its own tile's row gather.
        @pl.when(i == 0)
        def _():
            gather(0, 0, do_wait=False)

        # Prefetch: start the NEXT tile's gather into the other slot so its
        # HBM latency hides under this tile's two MXU matmuls (all indices are
        # already in SMEM via scalar prefetch).
        @pl.when(i + 1 < n_tiles)
        def _():
            gather(i + 1, next_slot, do_wait=False)

    # Wait for this tile's rows to land in our slot.
    gather(i, slot, do_wait=True)

    x = x_buf[slot] if num_slots > 1 else x_buf[0]
    w1 = w1_ref[...]
    w2 = w2_ref[...]
    if compute_dtype is not None:
        x = x.astype(compute_dtype)
        w1 = w1.astype(compute_dtype)
        w2 = w2.astype(compute_dtype)

    h = jnp.dot(x, w1, preferred_element_type=jnp.float32)
    h = jnp.maximum(h + b1_ref[...].astype(jnp.float32), 0.0)   # ReLU in f32
    if compute_dtype is not None:
        h = h.astype(compute_dtype)
    elif w2.dtype != jnp.float32:
        h = h.astype(w2.dtype)
    y = jnp.dot(h, w2, preferred_element_type=jnp.float32)
    y = y + b2_ref[...].astype(jnp.float32)
    o_ref[...] = y.astype(o_ref.dtype)


def external_features_forward(feats, idx, w1, b1, w2, b2, *, compute_dtype=None):
    """y = relu(feats[idx] @ w1 + b1) @ w2 + b2, fused in one Pallas TPU kernel.

    compute_dtype: optionally jnp.bfloat16 to cast the matmul operands
    (~3x MXU throughput on v6e/v7x); accumulation / bias / ReLU stay in f32.
    """
    N, F = feats.shape
    H = w1.shape[1]
    B = idx.shape[0]
    dt = feats.dtype
    itemsize = jnp.dtype(dt).itemsize
    sub = {4: 8, 2: 16, 1: 32}.get(itemsize, 8)   # min sublane tile for dtype

    # Lane-dense padding: unmasked stores, full MXU lane usage.
    F_pad = _round_up(F, 128)
    H_pad = _round_up(H, 128)

    vmem_budget = int(0.8 * _vmem_capacity_bytes())   # ~102 MiB v5e/v6e, ~51 MiB v7x

    # Batch tile: 256 feeds the 256-wide MXU on v6e/v7x while keeping >= 2 grid
    # tiles; 128 for medium batches; a single small tile for toy batches.
    if B >= 512:
        tb = 256
    elif B > 64:
        tb = 128
    else:
        tb = max(sub, _round_up(B, sub))
    # Shrink if the double-buffered gather scratch would eat too much VMEM.
    while tb > sub and 2 * tb * F_pad * itemsize > vmem_budget // 3:
        tb = max(sub, tb // 2)

    B_pad = _round_up(B, tb)
    n_tiles = B_pad // tb
    num_slots = 2 if n_tiles > 1 else 1

    # VMEM bookkeeping (worst case: double-buffered resident weights).
    weight_bytes = (F_pad * H_pad + H_pad * H_pad + 2 * H_pad) * itemsize
    gather_bytes = num_slots * tb * F_pad * itemsize
    out_bytes = 2 * tb * H_pad * itemsize
    work_bytes = 4 * tb * max(F_pad, H_pad) * 4
    table_bytes = N * F_pad * itemsize

    # Keep the table resident in VMEM only when (a) it fits next to the
    # weights / scratch and (b) one forward pass gathers at least a table's
    # worth of rows (B_pad >= N) — otherwise the one-off bulk table load costs
    # more HBM traffic than the (prefetch-hidden) per-row gather.
    feats_resident = (
        B_pad >= N
        and table_bytes + 2 * weight_bytes + gather_bytes + out_bytes + work_bytes
        <= vmem_budget)
    # TODO(synk): for F/H so large that resident W1/W2 (+ gather scratch) do
    # not fit the VMEM budget (v7x: 64 MiB), add a K-tiled reduction grid axis
    # over F with an f32 accumulator (init/finalize via pl.when) instead of a
    # fully-resident W1.

    feats_p = jnp.pad(feats, ((0, 0), (0, F_pad - F)))
    w1_p = jnp.pad(w1, ((0, F_pad - F), (0, H_pad - H)))
    b1_p = jnp.pad(jnp.reshape(b1, (1, -1)), ((0, 0), (0, H_pad - H)))
    w2_p = jnp.pad(w2, ((0, H_pad - H), (0, H_pad - H)))
    b2_p = jnp.pad(jnp.reshape(b2, (1, -1)), ((0, 0), (0, H_pad - H)))
    idx_p = jnp.pad(idx.astype(jnp.int32), (0, B_pad - B))

    flops = 2 * B_pad * F_pad * H_pad + 2 * B_pad * H_pad * H_pad
    gather_rows = N if feats_resident else B_pad
    bytes_accessed = itemsize * (
        gather_rows * F_pad
        + F_pad * H_pad + H_pad * H_pad + 2 * H_pad
        + B_pad * H_pad) + 4 * B_pad

    kernel = functools.partial(
        _gathered_mlp_kernel, batch=B, n_tiles=n_tiles,
        padded_tail=(B_pad != B), compute_dtype=compute_dtype)

    def run(single_buffer):
        # Resident operands (constant index_map). With pl.Buffered(1) they are
        # not needlessly double-buffered, halving their VMEM footprint.
        def resident_spec(shape):
            index_map = lambda i, idx_ref: (0,) * len(shape)
            if single_buffer:
                return pl.BlockSpec(shape, index_map,
                                    pipeline_mode=pl.Buffered(1))
            return pl.BlockSpec(shape, index_map)

        feats_spec = (resident_spec((N, F_pad)) if feats_resident
                      else pl.BlockSpec(memory_space=pl.ANY))

        grid_spec = pltpu.PrefetchScalarGridSpec(
            num_scalar_prefetch=1,                       # idx -> SMEM
            grid=(n_tiles,),
            in_specs=[
                feats_spec,                              # feature table
                resident_spec((F_pad, H_pad)),           # W1
                resident_spec((1, H_pad)),               # b1
                resident_spec((H_pad, H_pad)),           # W2
                resident_spec((1, H_pad)),               # b2
            ],
            out_specs=pl.BlockSpec((tb, H_pad), lambda i, idx_ref: (i, 0)),
            scratch_shapes=[
                pltpu.VMEM((num_slots, tb, F_pad), dt),     # gather slots
                pltpu.SemaphoreType.DMA((num_slots, tb)),   # per-row DMA sems
            ])

        return pl.pallas_call(
            kernel,
            out_shape=jax.ShapeDtypeStruct((B_pad, H_pad), dt),
            grid_spec=grid_spec,
            # The cross-step gather prefetch carries VMEM/semaphore state
            # between grid steps, so the batch axis must stay "arbitrary"
            # (megacore sharding would break the slot priming). Per-core
            # splitting on v7x would need pl.core_map.
            compiler_params=pltpu.CompilerParams(
                dimension_semantics=("arbitrary",),
                vmem_limit_bytes=vmem_budget),
            cost_estimate=pl.CostEstimate(
                flops=int(flops), transcendentals=0,
                bytes_accessed=int(bytes_accessed)),
        )(idx_p, feats_p, w1_p, b1_p, w2_p, b2_p)

    try:
        out = run(single_buffer=True)
    except Exception:
        # pipeline_mode=pl.Buffered(1) not supported by this jax version —
        # fall back to default (double-buffered) resident specs.
        out = run(single_buffer=False)

    # Slice off batch / lane padding (identity when already aligned).
    return out[:B, :H]


def init_params(key, in_dim, out_dim, dtype=jnp.float32):
    """Matches reset_parameters(): xavier_normal_ weights, PyTorch Linear
    default uniform biases. Weights stored (in_dim, out_dim)."""
    k1, k2, k3, k4 = jax.random.split(key, 4)

    def xavier_normal(k, fan_in, fan_out):
        std = (2.0 / (fan_in + fan_out)) ** 0.5
        return (std * jax.random.normal(k, (fan_in, fan_out))).astype(dtype)

    def bias_uniform(k, fan_in, fan_out):
        bound = 1.0 / (fan_in ** 0.5)
        return jax.random.uniform(k, (1, fan_out), minval=-bound,
                                  maxval=bound).astype(dtype)

    w1 = xavier_normal(k1, in_dim, out_dim)
    b1 = bias_uniform(k2, in_dim, out_dim)
    w2 = xavier_normal(k3, out_dim, out_dim)
    b2 = bias_uniform(k4, out_dim, out_dim)
    return w1, b1, w2, b2


def reference_forward(feats, idx, w1, b1, w2, b2):
    # activation_map: only ReLU implemented (other activations are a one-line
    # VPU/EUP change in the kernel tail).
    x = feats[idx]
    h = jnp.maximum(x @ w1 + b1, 0.0)
    return h @ w2 + b2


if __name__ == "__main__":
    key = jax.random.PRNGKey(0)
    k_feats, k_params = jax.random.split(key)

    N, F = 16, 32          # external feature table: 16 rows, 32 features
    H = 32                 # out_feats_dim
    B = 8                  # number of target indices

    feats = jax.random.normal(k_feats, (N, F), dtype=jnp.float32)
    idx = jnp.array([3, 0, 7, 15, 2, 9, 4, 11], dtype=jnp.int32)

    w1, b1, w2, b2 = init_params(k_params, F, H)

    out = external_features_forward(feats, idx, w1, b1, w2, b2)
    out = jax.block_until_ready(out)

    ref = reference_forward(feats, idx, w1, b1, w2, b2)
    assert out.shape == (B, H)
    assert jnp.allclose(out, ref, atol=1e-5, rtol=1e-5), "mismatch vs reference"

    print("KERNEL_OK")
</pallas_src>

<mosaic_0001>
module attributes {stable_mosaic.version = 11 : i64} {
  func.func @_gathered_mlp_kernel(%arg0: i32, %arg1: memref<8xi32, #tpu.memory_space<smem>>, %arg2: memref<16x128xf32, #tpu.memory_space<any>>, %arg3: memref<128x128xf32, #tpu.memory_space<vmem>>, %arg4: memref<1x128xf32, #tpu.memory_space<vmem>>, %arg5: memref<128x128xf32, #tpu.memory_space<vmem>>, %arg6: memref<1x128xf32, #tpu.memory_space<vmem>>, %arg7: memref<8x128xf32, #tpu.memory_space<vmem>>, %arg8: memref<1x8x128xf32, #tpu.memory_space<vmem>>, %arg9: memref<1x8x!tpu.dma_semaphore, #tpu.memory_space<semaphore_mem>>) attributes {dimension_semantics = [#tpu.dimension_semantics<arbitrary>], iteration_bounds = array<i64: 1>, scalar_prefetch = 1 : i64, scratch_operands = 2 : i64, tpu.core_type = #tpu.core_type<tc>, window_params = [{}, {pipeline_mode = #tpu.pipeline_mode<synchronous>, transform_indices = @transform_1, window_bounds = array<i64: 128, 128>}, {pipeline_mode = #tpu.pipeline_mode<synchronous>, transform_indices = @transform_2, window_bounds = array<i64: 1, 128>}, {pipeline_mode = #tpu.pipeline_mode<synchronous>, transform_indices = @transform_3, window_bounds = array<i64: 128, 128>}, {pipeline_mode = #tpu.pipeline_mode<synchronous>, transform_indices = @transform_4, window_bounds = array<i64: 1, 128>}, {transform_indices = @transform_5, window_bounds = array<i64: 8, 128>}]} {
    %c0_i32 = arith.constant 0 : i32
    %c8_i32 = arith.constant 8 : i32
    %0 = arith.addi %c0_i32, %c8_i32 : i32
    %c1_i32 = arith.constant 1 : i32
    scf.for %arg10 = %c0_i32 to %0 step %c1_i32  : i32 {
      %c1_i32_20 = arith.constant 1 : i32
      %18 = arith.muli %arg10, %c1_i32_20 : i32
      %c0_i32_21 = arith.constant 0 : i32
      %19 = arith.addi %c0_i32_21, %18 : i32
      %c0_i32_22 = arith.constant 0 : i32
      %20 = arith.addi %c0_i32_22, %19 : i32
      %21 = arith.index_cast %20 : i32 to index
      %22 = memref.load %arg1[%21] : memref<8xi32, #tpu.memory_space<smem>>
      %c0_i32_23 = arith.constant 0 : i32
      %c0_i32_24 = arith.constant 0 : i32
      %c0_i32_25 = arith.constant 0 : i32
      %23 = tpu.memref_slice %arg2[%22, %c0_i32_25] : memref<16x128xf32, #tpu.memory_space<any>> -> memref<1x128xf32, #tpu.memory_space<any>>
      %c0_i32_26 = arith.constant 0 : i32
      %24 = tpu.memref_slice %arg8[%c0_i32_23, %19, %c0_i32_26] : memref<1x8x128xf32, #tpu.memory_space<vmem>> -> memref<1x1x128xf32, #tpu.memory_space<vmem>>
      %25 = tpu.memref_squeeze %24 : memref<1x1x128xf32, #tpu.memory_space<vmem>> -> memref<1x128xf32, #tpu.memory_space<vmem>>
      %26 = tpu.memref_slice %arg9[%c0_i32_24, %19] : memref<1x8x!tpu.dma_semaphore, #tpu.memory_space<semaphore_mem>> -> memref<1x1x!tpu.dma_semaphore, #tpu.memory_space<semaphore_mem>>
      %27 = tpu.memref_squeeze %26 : memref<1x1x!tpu.dma_semaphore, #tpu.memory_space<semaphore_mem>> -> memref<!tpu.dma_semaphore, #tpu.memory_space<semaphore_mem>>
      tpu.enqueue_dma source(%23 : memref<1x128xf32, #tpu.memory_space<any>>) target(%25 : memref<1x128xf32, #tpu.memory_space<vmem>>) target_semaphore(%27 : memref<!tpu.dma_semaphore, #tpu.memory_space<semaphore_mem>>)
    }
    %c8_i32_0 = arith.constant 8 : i32
    %c8_i32_1 = arith.constant 8 : i32
    %1 = arith.muli %arg0, %c8_i32_1 : i32
    %c0_i32_2 = arith.constant 0 : i32
    %c8_i32_3 = arith.constant 8 : i32
    %2 = arith.addi %c0_i32_2, %c8_i32_3 : i32
    %c1_i32_4 = arith.constant 1 : i32
    scf.for %arg10 = %c0_i32_2 to %2 step %c1_i32_4  : i32 {
      %c1_i32_20 = arith.constant 1 : i32
      %18 = arith.muli %arg10, %c1_i32_20 : i32
      %c0_i32_21 = arith.constant 0 : i32
      %19 = arith.addi %c0_i32_21, %18 : i32
      %20 = arith.addi %1, %19 : i32
      %21 = arith.index_cast %20 : i32 to index
      %22 = memref.load %arg1[%21] : memref<8xi32, #tpu.memory_space<smem>>
      %c0_i32_22 = arith.constant 0 : i32
      %c0_i32_23 = arith.constant 0 : i32
      %c0_i32_24 = arith.constant 0 : i32
      %23 = tpu.memref_slice %arg2[%22, %c0_i32_24] : memref<16x128xf32, #tpu.memory_space<any>> -> memref<1x128xf32, #tpu.memory_space<any>>
      %c0_i32_25 = arith.constant 0 : i32
      %24 = tpu.memref_slice %arg8[%c0_i32_22, %19, %c0_i32_25] : memref<1x8x128xf32, #tpu.memory_space<vmem>> -> memref<1x1x128xf32, #tpu.memory_space<vmem>>
      %25 = tpu.memref_squeeze %24 : memref<1x1x128xf32, #tpu.memory_space<vmem>> -> memref<1x128xf32, #tpu.memory_space<vmem>>
      %26 = tpu.memref_slice %arg9[%c0_i32_23, %19] : memref<1x8x!tpu.dma_semaphore, #tpu.memory_space<semaphore_mem>> -> memref<1x1x!tpu.dma_semaphore, #tpu.memory_space<semaphore_mem>>
      %27 = tpu.memref_squeeze %26 : memref<1x1x!tpu.dma_semaphore, #tpu.memory_space<semaphore_mem>> -> memref<!tpu.dma_semaphore, #tpu.memory_space<semaphore_mem>>
      tpu.wait_dma2 semaphore(%27 : memref<!tpu.dma_semaphore, #tpu.memory_space<semaphore_mem>>) src(%23 : memref<1x128xf32, #tpu.memory_space<any>>) dst(%25 : memref<1x128xf32, #tpu.memory_space<vmem>>)
    }
    %c8_i32_5 = arith.constant 8 : i32
    %c0 = arith.constant 0 : index
    %c0_6 = arith.constant 0 : index
    %c0_7 = arith.constant 0 : index
    %3 = vector.load %arg8[%c0, %c0_6, %c0_7] : memref<1x8x128xf32, #tpu.memory_space<vmem>>, vector<1x8x128xf32>
    %4 = vector.shape_cast %3 : vector<1x8x128xf32> to vector<8x128xf32>
    %c0_8 = arith.constant 0 : index
    %c0_9 = arith.constant 0 : index
    %5 = vector.load %arg3[%c0_8, %c0_9] : memref<128x128xf32, #tpu.memory_space<vmem>>, vector<128x128xf32>
    %c0_10 = arith.constant 0 : index
    %c0_11 = arith.constant 0 : index
    %6 = vector.load %arg5[%c0_10, %c0_11] : memref<128x128xf32, #tpu.memory_space<vmem>>, vector<128x128xf32>
    %cst = arith.constant dense<0.000000e+00> : vector<8x128xf32>
    %7 = tpu.matmul %4, %5, %cst {dimension_numbers = #tpu.dot_dimension_numbers<[1], [0], [0], [1], [0, 0, 1, 1], [], []>} : vector<8x128xf32>, vector<128x128xf32>, vector<8x128xf32> -> vector<8x128xf32>
    %c0_12 = arith.constant 0 : index
    %c0_13 = arith.constant 0 : index
    %8 = vector.load %arg4[%c0_12, %c0_13] : memref<1x128xf32, #tpu.memory_space<vmem>>, vector<1x128xf32>
    %9 = vector.broadcast %8 : vector<1x128xf32> to vector<8x128xf32>
    %10 = arith.addf %7, %9 : vector<8x128xf32>
    %cst_14 = arith.constant 0.000000e+00 : f32
    %11 = vector.broadcast %cst_14 : f32 to vector<8x128xf32>
    %12 = arith.maximumf %10, %11 : vector<8x128xf32>
    %cst_15 = arith.constant dense<0.000000e+00> : vector<8x128xf32>
    %13 = tpu.matmul %12, %6, %cst_15 {dimension_numbers = #tpu.dot_dimension_numbers<[1], [0], [0], [1], [0, 0, 1, 1], [], []>} : vector<8x128xf32>, vector<128x128xf32>, vector<8x128xf32> -> vector<8x128xf32>
    %c0_16 = arith.constant 0 : index
    %c0_17 = arith.constant 0 : index
    %14 = vector.load %arg6[%c0_16, %c0_17] : memref<1x128xf32, #tpu.memory_space<vmem>>, vector<1x128xf32>
    %15 = vector.broadcast %14 : vector<1x128xf32> to vector<8x128xf32>
    %16 = arith.addf %13, %15 : vector<8x128xf32>
    %c0_18 = arith.constant 0 : index
    %c0_19 = arith.constant 0 : index
    %17 = vector.load %arg7[%c0_18, %c0_19] : memref<8x128xf32, #tpu.memory_space<vmem>>, vector<8x128xf32>
    tpu.vector_store %arg7[%c0_18, %c0_19], %16 {strides = array<i32>} : memref<8x128xf32, #tpu.memory_space<vmem>>, vector<8x128xf32>,
    return
  }
  func.func @transform_1(%arg0: i32, %arg1: memref<8xi32, #tpu.memory_space<smem>>) -> (i32, i32) {
    %c0_i32 = arith.constant 0 : i32
    %c0_i32_0 = arith.constant 0 : i32
    %c0_i32_1 = arith.constant 0 : i32
    return %c0_i32, %c0_i32_0 : i32, i32
  }
  func.func @transform_2(%arg0: i32, %arg1: memref<8xi32, #tpu.memory_space<smem>>) -> (i32, i32) {
    %c0_i32 = arith.constant 0 : i32
    %c0_i32_0 = arith.constant 0 : i32
    %c0_i32_1 = arith.constant 0 : i32
    return %c0_i32, %c0_i32_0 : i32, i32
  }
  func.func @transform_3(%arg0: i32, %arg1: memref<8xi32, #tpu.memory_space<smem>>) -> (i32, i32) {
    %c0_i32 = arith.constant 0 : i32
    %c0_i32_0 = arith.constant 0 : i32
    %c0_i32_1 = arith.constant 0 : i32
    return %c0_i32, %c0_i32_0 : i32, i32
  }
  func.func @transform_4(%arg0: i32, %arg1: memref<8xi32, #tpu.memory_space<smem>>) -> (i32, i32) {
    %c0_i32 = arith.constant 0 : i32
    %c0_i32_0 = arith.constant 0 : i32
    %c0_i32_1 = arith.constant 0 : i32
    return %c0_i32, %c0_i32_0 : i32, i32
  }
  func.func @transform_5(%arg0: i32, %arg1: memref<8xi32, #tpu.memory_space<smem>>) -> (i32, i32) {
    %c0_i32 = arith.constant 0 : i32
    %c0_i32_0 = arith.constant 0 : i32
    return %arg0, %c0_i32 : i32, i32
  }
}

module attributes {stable_mosaic.version = 11 : i64} {
  func.func @_gathered_mlp_kernel(%arg0: i32, %arg1: memref<8xi32, #tpu.memory_space<smem>>, %arg2: memref<16x128xf32, #tpu.memory_space<any>>, %arg3: memref<128x128xf32, #tpu.memory_space<vmem>>, %arg4: memref<1x128xf32, #tpu.memory_space<vmem>>, %arg5: memref<128x128xf32, #tpu.memory_space<vmem>>, %arg6: memref<1x128xf32, #tpu.memory_space<vmem>>, %arg7: memref<8x128xf32, #tpu.memory_space<vmem>>, %arg8: memref<1x8x128xf32, #tpu.memory_space<vmem>>, %arg9: memref<1x8x!tpu.dma_semaphore, #tpu.memory_space<semaphore_mem>>) attributes {dimension_semantics = [#tpu.dimension_semantics<arbitrary>], iteration_bounds = array<i64: 1>, scalar_prefetch = 1 : i64, scratch_operands = 2 : i64, tpu.core_type = #tpu.core_type<tc>, window_params = [{}, {pipeline_mode = #tpu.pipeline_mode<synchronous>, transform_indices = @transform_1, window_bounds = array<i64: 128, 128>}, {pipeline_mode = #tpu.pipeline_mode<synchronous>, transform_indices = @transform_2, window_bounds = array<i64: 1, 128>}, {pipeline_mode = #tpu.pipeline_mode<synchronous>, transform_indices = @transform_3, window_bounds = array<i64: 128, 128>}, {pipeline_mode = #tpu.pipeline_mode<synchronous>, transform_indices = @transform_4, window_bounds = array<i64: 1, 128>}, {transform_indices = @transform_5, window_bounds = array<i64: 8, 128>}]} {
    %c0_i32 = arith.constant 0 : i32
    %c8_i32 = arith.constant 8 : i32
    %0 = arith.addi %c0_i32, %c8_i32 : i32
    %c1_i32 = arith.constant 1 : i32
    scf.for %arg10 = %c0_i32 to %0 step %c1_i32  : i32 {
      %c1_i32_20 = arith.constant 1 : i32
      %18 = arith.muli %arg10, %c1_i32_20 : i32
      %c0_i32_21 = arith.constant 0 : i32
      %19 = arith.addi %c0_i32_21, %18 : i32
      %c0_i32_22 = arith.constant 0 : i32
      %20 = arith.addi %c0_i32_22, %19 : i32
      %21 = arith.index_cast %20 : i32 to index
      %22 = memref.load %arg1[%21] : memref<8xi32, #tpu.memory_space<smem>>
      %c0_i32_23 = arith.constant 0 : i32
      %c0_i32_24 = arith.constant 0 : i32
      %c0_i32_25 = arith.constant 0 : i32
      %23 = tpu.memref_slice %arg2[%22, %c0_i32_25] : memref<16x128xf32, #tpu.memory_space<any>> -> memref<1x128xf32, #tpu.memory_space<any>>
      %c0_i32_26 = arith.constant 0 : i32
      %24 = tpu.memref_slice %arg8[%c0_i32_23, %19, %c0_i32_26] : memref<1x8x128xf32, #tpu.memory_space<vmem>> -> memref<1x1x128xf32, #tpu.memory_space<vmem>>
      %25 = tpu.memref_squeeze %24 : memref<1x1x128xf32, #tpu.memory_space<vmem>> -> memref<1x128xf32, #tpu.memory_space<vmem>>
      %26 = tpu.memref_slice %arg9[%c0_i32_24, %19] : memref<1x8x!tpu.dma_semaphore, #tpu.memory_space<semaphore_mem>> -> memref<1x1x!tpu.dma_semaphore, #tpu.memory_space<semaphore_mem>>
      %27 = tpu.memref_squeeze %26 : memref<1x1x!tpu.dma_semaphore, #tpu.memory_space<semaphore_mem>> -> memref<!tpu.dma_semaphore, #tpu.memory_space<semaphore_mem>>
      tpu.enqueue_dma source(%23 : memref<1x128xf32, #tpu.memory_space<any>>) target(%25 : memref<1x128xf32, #tpu.memory_space<vmem>>) target_semaphore(%27 : memref<!tpu.dma_semaphore, #tpu.memory_space<semaphore_mem>>)
    }
    %c8_i32_0 = arith.constant 8 : i32
    %c8_i32_1 = arith.constant 8 : i32
    %1 = arith.muli %arg0, %c8_i32_1 : i32
    %c0_i32_2 = arith.constant 0 : i32
    %c8_i32_3 = arith.constant 8 : i32
    %2 = arith.addi %c0_i32_2, %c8_i32_3 : i32
    %c1_i32_4 = arith.constant 1 : i32
    scf.for %arg10 = %c0_i32_2 to %2 step %c1_i32_4  : i32 {
      %c1_i32_20 = arith.constant 1 : i32
      %18 = arith.muli %arg10, %c1_i32_20 : i32
      %c0_i32_21 = arith.constant 0 : i32
      %19 = arith.addi %c0_i32_21, %18 : i32
      %20 = arith.addi %1, %19 : i32
      %21 = arith.index_cast %20 : i32 to index
      %22 = memref.load %arg1[%21] : memref<8xi32, #tpu.memory_space<smem>>
      %c0_i32_22 = arith.constant 0 : i32
      %c0_i32_23 = arith.constant 0 : i32
      %c0_i32_24 = arith.constant 0 : i32
      %23 = tpu.memref_slice %arg2[%22, %c0_i32_24] : memref<16x128xf32, #tpu.memory_space<any>> -> memref<1x128xf32, #tpu.memory_space<any>>
      %c0_i32_25 = arith.constant 0 : i32
      %24 = tpu.memref_slice %arg8[%c0_i32_22, %19, %c0_i32_25] : memref<1x8x128xf32, #tpu.memory_space<vmem>> -> memref<1x1x128xf32, #tpu.memory_space<vmem>>
      %25 = tpu.memref_squeeze %24 : memref<1x1x128xf32, #tpu.memory_space<vmem>> -> memref<1x128xf32, #tpu.memory_space<vmem>>
      %26 = tpu.memref_slice %arg9[%c0_i32_23, %19] : memref<1x8x!tpu.dma_semaphore, #tpu.memory_space<semaphore_mem>> -> memref<1x1x!tpu.dma_semaphore, #tpu.memory_space<semaphore_mem>>
      %27 = tpu.memref_squeeze %26 : memref<1x1x!tpu.dma_semaphore, #tpu.memory_space<semaphore_mem>> -> memref<!tpu.dma_semaphore, #tpu.memory_space<semaphore_mem>>
      tpu.wait_dma2 semaphore(%27 : memref<!tpu.dma_semaphore, #tpu.memory_space<semaphore_mem>>) src(%23 : memref<1x128xf32, #tpu.memory_space<any>>) dst(%25 : memref<1x128xf32, #tpu.memory_space<vmem>>)
    }
    %c8_i32_5 = arith.constant 8 : i32
    %c0 = arith.constant 0 : index
    %c0_6 = arith.constant 0 : index
    %c0_7 = arith.constant 0 : index
    %3 = vector.load %arg8[%c0, %c0_6, %c0_7] : memref<1x8x128xf32, #tpu.memory_space<vmem>>, vector<1x8x128xf32>
    %4 = vector.shape_cast %3 : vector<1x8x128xf32> to vector<8x128xf32>
    %c0_8 = arith.constant 0 : index
    %c0_9 = arith.constant 0 : index
    %5 = vector.load %arg3[%c0_8, %c0_9] : memref<128x128xf32, #tpu.memory_space<vmem>>, vector<128x128xf32>
    %c0_10 = arith.constant 0 : index
    %c0_11 = arith.constant 0 : index
    %6 = vector.load %arg5[%c0_10, %c0_11] : memref<128x128xf32, #tpu.memory_space<vmem>>, vector<128x128xf32>
    %cst = arith.constant dense<0.000000e+00> : vector<8x128xf32>
    %7 = tpu.matmul %4, %5, %cst {dimension_numbers = #tpu.dot_dimension_numbers<[1], [0], [0], [1], [0, 0, 1, 1], [], []>} : vector<8x128xf32>, vector<128x128xf32>, vector<8x128xf32> -> vector<8x128xf32>
    %c0_12 = arith.constant 0 : index
    %c0_13 = arith.constant 0 : index
    %8 = vector.load %arg4[%c0_12, %c0_13] : memref<1x128xf32, #tpu.memory_space<vmem>>, vector<1x128xf32>
    %9 = vector.broadcast %8 : vector<1x128xf32> to vector<8x128xf32>
    %10 = arith.addf %7, %9 : vector<8x128xf32>
    %cst_14 = arith.constant 0.000000e+00 : f32
    %11 = vector.broadcast %cst_14 : f32 to vector<8x128xf32>
    %12 = arith.maximumf %10, %11 : vector<8x128xf32>
    %cst_15 = arith.constant dense<0.000000e+00> : vector<8x128xf32>
    %13 = tpu.matmul %12, %6, %cst_15 {dimension_numbers = #tpu.dot_dimension_numbers<[1], [0], [0], [1], [0, 0, 1, 1], [], []>} : vector<8x128xf32>, vector<128x128xf32>, vector<8x128xf32> -> vector<8x128xf32>
    %c0_16 = arith.constant 0 : index
    %c0_17 = arith.constant 0 : index
    %14 = vector.load %arg6[%c0_16, %c0_17] : memref<1x128xf32, #tpu.memory_space<vmem>>, vector<1x128xf32>
    %15 = vector.broadcast %14 : vector<1x128xf32> to vector<8x128xf32>
    %16 = arith.addf %13, %15 : vector<8x128xf32>
    %c0_18 = arith.constant 0 : index
    %c0_19 = arith.constant 0 : index
    %17 = vector.load %arg7[%c0_18, %c0_19] : memref<8x128xf32, #tpu.memory_space<vmem>>, vector<8x128xf32>
    tpu.vector_store %arg7[%c0_18, %c0_19], %16 {strides = array<i32>} : memref<8x128xf32, #tpu.memory_space<vmem>>, vector<8x128xf32>,
    return
  }
  func.func @transform_1(%arg0: i32, %arg1: memref<8xi32, #tpu.memory_space<smem>>) -> (i32, i32) {
    %c0_i32 = arith.constant 0 : i32
    %c0_i32_0 = arith.constant 0 : i32
    %c0_i32_1 = arith.constant 0 : i32
    return %c0_i32, %c0_i32_0 : i32, i32
  }
  func.func @transform_2(%arg0: i32, %arg1: memref<8xi32, #tpu.memory_space<smem>>) -> (i32, i32) {
    %c0_i32 = arith.constant 0 : i32
    %c0_i32_0 = arith.constant 0 : i32
    %c0_i32_1 = arith.constant 0 : i32
    return %c0_i32, %c0_i32_0 : i32, i32
  }
  func.func @transform_3(%arg0: i32, %arg1: memref<8xi32, #tpu.memory_space<smem>>) -> (i32, i32) {
    %c0_i32 = arith.constant 0 : i32
    %c0_i32_0 = arith.constant 0 : i32
    %c0_i32_1 = arith.constant 0 : i32
    return %c0_i32, %c0_i32_0 : i32, i32
  }
  func.func @transform_4(%arg0: i32, %arg1: memref<8xi32, #tpu.memory_space<smem>>) -> (i32, i32) {
    %c0_i32 = arith.constant 0 : i32
    %c0_i32_0 = arith.constant 0 : i32
    %c0_i32_1 = arith.constant 0 : i32
    return %c0_i32, %c0_i32_0 : i32, i32
  }
  func.func @transform_5(%arg0: i32, %arg1: memref<8xi32, #tpu.memory_space<smem>>) -> (i32, i32) {
    %c0_i32 = arith.constant 0 : i32
    %c0_i32_0 = arith.constant 0 : i32
    return %arg0, %c0_i32 : i32, i32
  }
}

</mosaic_0001>

<llo_original>
// kernel: tpu_custom_call.1
$region0: #{tpu_custom_call.1}
  #allocation0 [shape = 'u32[]', space=smem, size = 0x4, offset = 0x4, fixed_abs, tag = 'smem constant byte address 0x4 - core index']
  #allocation1 [shape = 'u32[144,128]{1,0:T(1,128)}', space=vmem, size = 0x12000, scoped, tag = 'internal scratch']
  #allocation2 [shape = 'f32[1,8,128]{2,1,0:T(8,128)}', space=vmem, size = 0x1000, scoped, tag = 'scratch operand']
  #allocation3 [shape = 's32[8]{0}', space=sflag, size = 0x20, scoped, tag = 'scratch operand']
  #allocation4 [shape = 's32[1]{0}', space=sflag, size = 0x4, scoped, tag = 'scoped memory for tpu_custom_call.1']
  #allocation5 [shape = 'u8[512]{0}', space=smem, size = 0x200, scoped, tag = 'prefetched SMEM operand 0']
  #allocation12 [shape = 's32[]', space=sflag, size = 0x4, offset = 0, fixed_abs, tag = 'sflag constant byte address 0x0 - dummy sync flag']
  #allocation13 [shape = 's32[]', space=sflag, size = 0x4, offset = 0, fixed_abs, tag = 'sflag constant byte address 0x0 - dummy sync flag']
  #allocation14 [shape = 'u32[]', space=smem, size = 0x4, offset = 0x44, fixed_abs, tag = 'smem constant byte address 0x44 - assertion arg 0']
  #allocation15 [shape = 'u32[]', space=smem, size = 0x4, offset = 0x48, fixed_abs, tag = 'smem constant byte address 0x48 - assertion arg 1']
  %s0 = inlined_call_operand.hbm [shape: s32[8], index: 0, kind: input, shape index: {}]
  %s1 = inlined_call_operand.hbm [shape: f32[16,128], index: 1, kind: input, shape index: {}]
  %s2 = inlined_call_operand.hbm [shape: f32[128,128], index: 2, kind: input, shape index: {}]
  %s3 = inlined_call_operand.vmem [shape: f32[1,128], index: 3, kind: input, shape index: {}]
  %s4 = inlined_call_operand.hbm [shape: f32[128,128], index: 4, kind: input, shape index: {}]
  %s5 = inlined_call_operand.vmem [shape: f32[1,128], index: 5, kind: input, shape index: {}]
  %s6 = inlined_call_operand.hbm [shape: f32[8,128], index: 6, kind: output, shape index: {}]
  %s7 = sld [smem:[#allocation0]]
  $region52: #{tpu_custom_call.1} parent=0
    _
  %s9 = ssub.s32 1, %s7
  %s10 = scalar_select 0, %s9, %s7
  %12 = dma.hbm_to_smem %s0, 16, [#allocation5], [#allocation4]
  %13 = dma.done [#allocation4], 16
  %14 = sfence
  $region1: #{tpu_custom_call.1} parent=0
    #allocation6 [shape = 'u8[65536]{0}', space=vmem, size = 0x10000, scoped, tag = 'input window, operand 2, single buffered']
    #allocation7 [shape = 's32[1]{0}', space=sflag, size = 0x4, scoped, tag = 'scoped memory for tpu_custom_call.1']
    #allocation8 [shape = 's32[1]{0}', space=sflag, size = 0x4, scoped, tag = 'scoped memory for tpu_custom_call.1']
    #allocation9 [shape = 'u8[65536]{0}', space=vmem, size = 0x10000, scoped, tag = 'input window, operand 4, single buffered']
    #allocation10 [shape = 's32[1]{0}', space=sflag, size = 0x4, scoped, tag = 'scoped memory for tpu_custom_call.1']
    #allocation11 [shape = 'u8[4096]{0}', space=vmem, size = 0x1000, scoped, tag = 'output window, operand 0, single buffered']
    %15 = vsyncpa [#allocation7], 0
    %16 = vsyncpa [#allocation10], 0
    %17 = vsyncpa [#allocation8], 0
    // Predicated region
    $region2: #{tpu_custom_call.1} parent=1 // pred_check
      _
    $region3: #{tpu_custom_call.1} parent=1 // pred_check_branch
      %19 = sbr.rel (0) target = $region5
    $region4: #{tpu_custom_call.1} parent=1 // pred_region
      %s21 = ssub.s32 2048, 2048
      %22 = vsyncadd [#allocation7], %s21
      %s23 = sshll.u32 [#allocation6], 4
      %s24 = int_to_ptr.vmem [resolvable:$true] %s23
      %29 = dma.hbm_to_vmem [thread:$0]  %s2, 2048, %s24, [#allocation7], 128, 128, 8
    $region5: #{tpu_custom_call.1} parent=1 // pred_fallthru
      _
    // Predicated region
    $region6: #{tpu_custom_call.1} parent=1 // pred_check
      _
    $region7: #{tpu_custom_call.1} parent=1 // pred_check_branch
      %31 = sbr.rel (0) target = $region9
    $region8: #{tpu_custom_call.1} parent=1 // pred_region
      _
    $region9: #{tpu_custom_call.1} parent=1 // pred_fallthru
      _
    // Predicated region
    $region10: #{tpu_custom_call.1} parent=1 // pred_check
      _
    $region11: #{tpu_custom_call.1} parent=1 // pred_check_branch
      %33 = sbr.rel (0) target = $region13
    $region12: #{tpu_custom_call.1} parent=1 // pred_region
      %s35 = ssub.s32 2048, 2048
      %36 = vsyncadd [#allocation10], %s35
      %s37 = sshll.u32 [#allocation9], 4
      %s38 = int_to_ptr.vmem [resolvable:$true] %s37
      %43 = dma.hbm_to_vmem [thread:$0]  %s4, 2048, %s38, [#allocation10], 128, 128, 8
    $region13: #{tpu_custom_call.1} parent=1 // pred_fallthru
      _
    // Predicated region
    $region14: #{tpu_custom_call.1} parent=1 // pred_check
      _
    $region15: #{tpu_custom_call.1} parent=1 // pred_check_branch
      %45 = sbr.rel (0) target = $region17
    $region16: #{tpu_custom_call.1} parent=1 // pred_region
      _
    $region17: #{tpu_custom_call.1} parent=1 // pred_fallthru
      _
    // Predicated region
    $region18: #{tpu_custom_call.1} parent=1 // pred_check
      _
    $region19: #{tpu_custom_call.1} parent=1 // pred_check_branch
      %47 = sbr.rel (0) target = $region21
    $region20: #{tpu_custom_call.1} parent=1 // pred_region
      %48 = dma.done [#allocation7], 2048
    $region21: #{tpu_custom_call.1} parent=1 // pred_fallthru
      _
    // Predicated region
    $region22: #{tpu_custom_call.1} parent=1 // pred_check
      _
    $region23: #{tpu_custom_call.1} parent=1 // pred_check_branch
      %50 = sbr.rel (0) target = $region25
    $region24: #{tpu_custom_call.1} parent=1 // pred_region
      %51 = dma.done [#allocation10], 2048
    $region25: #{tpu_custom_call.1} parent=1 // pred_fallthru
      _
    loop: start=0, step=1, limit=8
    $region26: #{tpu_custom_call.1} parent=1 // loop_pre_header
      _
    $region27: #{tpu_custom_call.1} parent=1 // loop_header
      %s53 = sphi 0, %s57
      %p54 = scmp.ge.s32.totalorder %s53, 8
    $region28: #{tpu_custom_call.1} parent=1 // loop_header_branch
      %56 = sbr.rel (%p54) target = $region32
    $region29: #{tpu_custom_call.1} parent=1 // loop_body
      %s58 = sld [smem:[#allocation5 + %s53]]
      %s59 = smul.addr %s58, 16
      %s60 = scalar_lea.hbm %s1, %s59
      %s61 = scalar_lea.vmem [#allocation2], %s53
      %s62 = scalar_lea.sflag [#allocation3], %s53
      // Predicated region
      $region33: #{tpu_custom_call.1} parent=29 // pred_check
        _
      $region34: #{tpu_custom_call.1} parent=29 // pred_check_branch
        %64 = sbr.rel target = $region36
      $region35: #{tpu_custom_call.1} parent=29 // pred_region
        %65 = sst [smem:[#allocation14]] [#allocation13]
        %66 = sst [smem:[#allocation15]] [#allocation12]
      $region36: #{tpu_custom_call.1} parent=29 // pred_fallthru
        _
      %68 = shalt.err (0)
      %s70 = sshll.u32 %s61, 4
      %s71 = int_to_ptr.vmem [resolvable:$true] %s70
      %73 = dma.hbm_to_vmem [thread:$0]  %s60, 16, %s71, %s62
    $region30: #{tpu_custom_call.1} parent=1 // loop_footer
      %s57 = sadd.s32 1, %s53
    $region31: #{tpu_custom_call.1} parent=1 // loop_footer_branch
      %52 = sbr.rel target = $region27
    $region32: #{tpu_custom_call.1} parent=1 // loop_exit
      _
    %s74 = smul.u32 0, 8
    loop: start=0, step=1, limit=8
    $region37: #{tpu_custom_call.1} parent=1 // loop_pre_header
      _
    $region38: #{tpu_custom_call.1} parent=1 // loop_header
      %s76 = sphi 0, %s80
      %p77 = scmp.ge.s32.totalorder %s76, 8
    $region39: #{tpu_custom_call.1} parent=1 // loop_header_branch
      %79 = sbr.rel (%p77) target = $region43
    $region40: #{tpu_custom_call.1} parent=1 // loop_body
      %s81 = sadd.s32 %s74, %s76
      %s82 = sld [smem:[#allocation5 + %s81]]
      %s83 = scalar_lea.sflag [#allocation3], %s76
      %s84 = smul.u32 1, 1
      %s85 = sshll.u32 %s84, 4
      %86 = dma.done %s83, %s85
    $region41: #{tpu_custom_call.1} parent=1 // loop_footer
      %s80 = sadd.s32 1, %s76
    $region42: #{tpu_custom_call.1} parent=1 // loop_footer_branch
      %75 = sbr.rel target = $region38
    $region43: #{tpu_custom_call.1} parent=1 // loop_exit
      _
    %v87 = vld [vmem:[#allocation2] sm:$0xff]
    %v88 = vld [vmem:[#allocation6] sm:$0xff]
    %v89 = vld [vmem:[#allocation6 + $0x8] sm:$0xff]
    %v90 = vld [vmem:[#allocation6 + $0x10] sm:$0xff]
    %v91 = vld [vmem:[#allocation6 + $0x18] sm:$0xff]
    %v92 = vld [vmem:[#allocation6 + $0x20] sm:$0xff]
    %v93 = vld [vmem:[#allocation6 + $0x28] sm:$0xff]
    %v94 = vld [vmem:[#allocation6 + $0x30] sm:$0xff]
    %v95 = vld [vmem:[#allocation6 + $0x38] sm:$0xff]
    %v96 = vld [vmem:[#allocation6 + $0x40] sm:$0xff]
    %v97 = vld [vmem:[#allocation6 + $0x48] sm:$0xff]
    %v98 = vld [vmem:[#allocation6 + $0x50] sm:$0xff]
    %v99 = vld [vmem:[#allocation6 + $0x58] sm:$0xff]
    %v100 = vld [vmem:[#allocation6 + $0x60] sm:$0xff]
    %v101 = vld [vmem:[#allocation6 + $0x68] sm:$0xff]
    %v102 = vld [vmem:[#allocation6 + $0x70] sm:$0xff]
    %v103 = vld [vmem:[#allocation6 + $0x78] sm:$0xff]
    %v104 = vld [vmem:[#allocation9] sm:$0xff]
    %v105 = vld [vmem:[#allocation9 + $0x8] sm:$0xff]
    %v106 = vld [vmem:[#allocation9 + $0x10] sm:$0xff]
    %v107 = vld [vmem:[#allocation9 + $0x18] sm:$0xff]
    %v108 = vld [vmem:[#allocation9 + $0x20] sm:$0xff]
    %v109 = vld [vmem:[#allocation9 + $0x28] sm:$0xff]
    %v110 = vld [vmem:[#allocation9 + $0x30] sm:$0xff]
    %v111 = vld [vmem:[#allocation9 + $0x38] sm:$0xff]
    %v112 = vld [vmem:[#allocation9 + $0x40] sm:$0xff]
    %v113 = vld [vmem:[#allocation9 + $0x48] sm:$0xff]
    %v114 = vld [vmem:[#allocation9 + $0x50] sm:$0xff]
    %v115 = vld [vmem:[#allocation9 + $0x58] sm:$0xff]
    %v116 = vld [vmem:[#allocation9 + $0x60] sm:$0xff]
    %v117 = vld [vmem:[#allocation9 + $0x68] sm:$0xff]
    %v118 = vld [vmem:[#allocation9 + $0x70] sm:$0xff]
    %v119 = vld [vmem:[#allocation9 + $0x78] sm:$0xff]
    %v120 = vld [vmem:[%s3] sm:$0x1]
    %v122 = vlaneseq
    %v123 = vshrl.u32 %v122, 7
    %v124 = vsub.s32 0, %v123
    %v125 = vrot.slane %v120, %v124
    %127 = vmatprep.subr.mxu0 0.0
    %128 = vmatpush1.msra.mxu0 %v88
    %129 = vmatprep.subr.mxu0 0.0
    %130 = vmatpush1.msra.mxu0 %v89
    %131 = vmatprep.subr.mxu0 0.0
    %132 = vmatpush1.msra.mxu0 %v90
    %133 = vmatprep.subr.mxu0 0.0
    %134 = vmatpush1.msra.mxu0 %v91
    %135 = vmatprep.subr.mxu0 0.0
    %136 = vmatpush1.msra.mxu0 %v92
    %137 = vmatprep.subr.mxu0 0.0
    %138 = vmatpush1.msra.mxu0 %v93
    %139 = vmatprep.subr.mxu0 0.0
    %140 = vmatpush1.msra.mxu0 %v94
    %141 = vmatprep.subr.mxu0 0.0
    %142 = vmatpush1.msra.mxu0 %v95
    %143 = vmatprep.subr.mxu0 0.0
    %144 = vmatpush1.msra.mxu0 %v96
    %145 = vmatprep.subr.mxu0 0.0
    %146 = vmatpush1.msra.mxu0 %v97
    %147 = vmatprep.subr.mxu0 0.0
    %148 = vmatpush1.msra.mxu0 %v98
    %149 = vmatprep.subr.mxu0 0.0
    %150 = vmatpush1.msra.mxu0 %v99
    %151 = vmatprep.subr.mxu0 0.0
    %152 = vmatpush1.msra.mxu0 %v100
    %153 = vmatprep.subr.mxu0 0.0
    %154 = vmatpush1.msra.mxu0 %v101
    %155 = vmatprep.subr.mxu0 0.0
    %156 = vmatpush1.msra.mxu0 %v102
    %157 = vmatprep.subr.mxu0 0.0
    %158 = vmatpush1.msra.mxu0 %v103
    %159 = vmatprep.subr.mxu0 0.0
    %160 = vmatpush1.msra.mxu0 0.0
    %161 = vmatprep.subr.mxu0 0.0
    %162 = vmatpush1.msra.mxu0 0.0
    %163 = vmatprep.subr.mxu0 0.0
    %164 = vmatpush1.msra.mxu0 0.0
    %165 = vmatprep.subr.mxu0 0.0
    %166 = vmatpush1.msra.mxu0 0.0
    %167 = vmatprep.subr.mxu0 0.0
    %168 = vmatpush1.msra.mxu0 0.0
    %169 = vmatprep.subr.mxu0 0.0
    %170 = vmatpush1.msra.mxu0 0.0
    %171 = vmatprep.subr.mxu0 0.0
    %172 = vmatpush1.msra.mxu0 0.0
    %173 = vmatprep.subr.mxu0 0.0
    %174 = vmatpush1.msra.mxu0 0.0
    %175 = vmatprep.subr.mxu0 0.0
    %176 = vmatpush1.msra.mxu0 0.0
    %177 = vmatprep.subr.mxu0 0.0
    %178 = vmatpush1.msra.mxu0 0.0
    %179 = vmatprep.subr.mxu0 0.0
    %180 = vmatpush1.msra.mxu0 0.0
    %181 = vmatprep.subr.mxu0 0.0
    %182 = vmatpush1.msra.mxu0 0.0
    %183 = vmatprep.subr.mxu0 0.0
    %184 = vmatpush1.msra.mxu0 0.0
    %185 = vmatprep.subr.mxu0 0.0
    %186 = vmatpush1.msra.mxu0 0.0
    %187 = vmatprep.subr.mxu0 0.0
    %188 = vmatpush1.msra.mxu0 0.0
    %189 = vmatprep.subr.mxu0 0.0
    %190 = vmatpush1.msra.mxu0 0.0
    %191 = vmatprep.mubr.f32.mxu0 0.0
    %192 = vmatmul.mubr.f32.gmra.mrb[0].mxu0 %v87
    %v193 = vpop.f32.mrb[0].mxu0
    %v194 = vadd.f32 %v125, %v193
    %v195 = vpop.f32.mrb[0].mxu0
    %196 = vdwg.mxu0
    %v197 = vmax.f32 %v194, 0.0
    %v198 = vld [vmem:[%s5] sm:$0x1]
    %v200 = vlaneseq
    %v201 = vshrl.u32 %v200, 7
    %v202 = vsub.s32 0, %v201
    %v203 = vrot.slane %v198, %v202
    %205 = vmatprep.subr.mxu0 0.0
    %206 = vmatpush1.msra.mxu0 %v104
    %207 = vmatprep.subr.mxu0 0.0
    %208 = vmatpush1.msra.mxu0 %v105
    %209 = vmatprep.subr.mxu0 0.0
    %210 = vmatpush1.msra.mxu0 %v106
    %211 = vmatprep.subr.mxu0 0.0
    %212 = vmatpush1.msra.mxu0 %v107
    %213 = vmatprep.subr.mxu0 0.0
    %214 = vmatpush1.msra.mxu0 %v108
    %215 = vmatprep.subr.mxu0 0.0
    %216 = vmatpush1.msra.mxu0 %v109
    %217 = vmatprep.subr.mxu0 0.0
    %218 = vmatpush1.msra.mxu0 %v110
    %219 = vmatprep.subr.mxu0 0.0
    %220 = vmatpush1.msra.mxu0 %v111
    %221 = vmatprep.subr.mxu0 0.0
    %222 = vmatpush1.msra.mxu0 %v112
    %223 = vmatprep.subr.mxu0 0.0
    %224 = vmatpush1.msra.mxu0 %v113
    %225 = vmatprep.subr.mxu0 0.0
    %226 = vmatpush1.msra.mxu0 %v114
    %227 = vmatprep.subr.mxu0 0.0
    %228 = vmatpush1.msra.mxu0 %v115
    %229 = vmatprep.subr.mxu0 0.0
    %230 = vmatpush1.msra.mxu0 %v116
    %231 = vmatprep.subr.mxu0 0.0
    %232 = vmatpush1.msra.mxu0 %v117
    %233 = vmatprep.subr.mxu0 0.0
    %234 = vmatpush1.msra.mxu0 %v118
    %235 = vmatprep.subr.mxu0 0.0
    %236 = vmatpush1.msra.mxu0 %v119
    %237 = vmatprep.subr.mxu0 0.0
    %238 = vmatpush1.msra.mxu0 0.0
    %239 = vmatprep.subr.mxu0 0.0
    %240 = vmatpush1.msra.mxu0 0.0
    %241 = vmatprep.subr.mxu0 0.0
    %242 = vmatpush1.msra.mxu0 0.0
    %243 = vmatprep.subr.mxu0 0.0
    %244 = vmatpush1.msra.mxu0 0.0
    %245 = vmatprep.subr.mxu0 0.0
    %246 = vmatpush1.msra.mxu0 0.0
    %247 = vmatprep.subr.mxu0 0.0
    %248 = vmatpush1.msra.mxu0 0.0
    %249 = vmatprep.subr.mxu0 0.0
    %250 = vmatpush1.msra.mxu0 0.0
    %251 = vmatprep.subr.mxu0 0.0
    %252 = vmatpush1.msra.mxu0 0.0
    %253 = vmatprep.subr.mxu0 0.0
    %254 = vmatpush1.msra.mxu0 0.0
    %255 = vmatprep.subr.mxu0 0.0
    %256 = vmatpush1.msra.mxu0 0.0
    %257 = vmatprep.subr.mxu0 0.0
    %258 = vmatpush1.msra.mxu0 0.0
    %259 = vmatprep.subr.mxu0 0.0
    %260 = vmatpush1.msra.mxu0 0.0
    %261 = vmatprep.subr.mxu0 0.0
    %262 = vmatpush1.msra.mxu0 0.0
    %263 = vmatprep.subr.mxu0 0.0
    %264 = vmatpush1.msra.mxu0 0.0
    %265 = vmatprep.subr.mxu0 0.0
    %266 = vmatpush1.msra.mxu0 0.0
    %267 = vmatprep.subr.mxu0 0.0
    %268 = vmatpush1.msra.mxu0 0.0
    %269 = vmatprep.mubr.f32.mxu0 0.0
    %270 = vmatmul.mubr.f32.gmra.mrb[0].mxu0 %v197
    %v271 = vpop.f32.mrb[0].mxu0
    %v272 = vadd.f32 %v203, %v271
    %v273 = vpop.f32.mrb[0].mxu0
    %274 = vdwg.mxu0
    %275 = vst [vmem:[#allocation11] sm:$0xff] %v272
    // Predicated region
    $region44: #{tpu_custom_call.1} parent=1 // pred_check
      _
    $region45: #{tpu_custom_call.1} parent=1 // pred_check_branch
      %277 = sbr.rel (0) target = $region47
    $region46: #{tpu_custom_call.1} parent=1 // pred_region
      %s279 = ssub.s32 128, 128
      %280 = vsyncadd [#allocation8], %s279
      %s282 = sshll.u32 [#allocation11], 4
      %s283 = int_to_ptr.vmem [resolvable:$true] %s282
      %285 = dma.vmem_to_hbm [thread:$0]  %s283, 128, %s6, [#allocation8]
    $region47: #{tpu_custom_call.1} parent=1 // pred_fallthru
      _
    // Predicated region
    $region48: #{tpu_custom_call.1} parent=1 // pred_check
      _
    $region49: #{tpu_custom_call.1} parent=1 // pred_check_branch
      %287 = sbr.rel (0) target = $region51
    $region50: #{tpu_custom_call.1} parent=1 // pred_region
      %288 = dma.done [#allocation8], 128
    $region51: #{tpu_custom_call.1} parent=1 // pred_fallthru
      _
    %289 = vsyncpa [#allocation7], 1
    %290 = vsyncpa [#allocation10], 1
    %291 = vsyncpa [#allocation8], 1
  %292 = vsyncmov [#allocation3]
  %s293 = vpop.sfrf %292
  %p294 = scmp.eq.s32.totalorder %s293, 0
  %p295 = pneg %p294
  %297 = shalt.err (%p295)
  %s298 = scalar_lea.sflag [#allocation3], 1
  %299 = vsyncmov %s298
  %s300 = vpop.sfrf %299
  %p301 = scmp.eq.s32.totalorder %s300, 0
  %p302 = pneg %p301
  %304 = shalt.err (%p302)
  %s305 = scalar_lea.sflag [#allocation3], 2
  %306 = vsyncmov %s305
  %s307 = vpop.sfrf %306
  %p308 = scmp.eq.s32.totalorder %s307, 0
  %p309 = pneg %p308
  %311 = shalt.err (%p309)
  %s312 = scalar_lea.sflag [#allocation3], 3
  %313 = vsyncmov %s312
  %s314 = vpop.sfrf %313
  %p315 = scmp.eq.s32.totalorder %s314, 0
  %p316 = pneg %p315
  %318 = shalt.err (%p316)
  %s319 = scalar_lea.sflag [#allocation3], 4
  %320 = vsyncmov %s319
  %s321 = vpop.sfrf %320
  %p322 = scmp.eq.s32.totalorder %s321, 0
  %p323 = pneg %p322
  %325 = shalt.err (%p323)
  %s326 = scalar_lea.sflag [#allocation3], 5
  %327 = vsyncmov %s326
  %s328 = vpop.sfrf %327
  %p329 = scmp.eq.s32.totalorder %s328, 0
  %p330 = pneg %p329
  %332 = shalt.err (%p330)
  %s333 = scalar_lea.sflag [#allocation3], 6
  %334 = vsyncmov %s333
  %s335 = vpop.sfrf %334
  %p336 = scmp.eq.s32.totalorder %s335, 0
  %p337 = pneg %p336
  %339 = shalt.err (%p337)
  %s340 = scalar_lea.sflag [#allocation3], 7
  %341 = vsyncmov %s340
  %s342 = vpop.sfrf %341
  %p343 = scmp.eq.s32.totalorder %s342, 0
  %p344 = pneg %p343
  %346 = shalt.err (%p344)

// kernel: tpu_custom_call.1
$region0: #{tpu_custom_call.1}
  #allocation0 [shape = 'u32[]', space=smem, size = 0x4, offset = 0x4, fixed_abs, tag = 'smem constant byte address 0x4 - core index']
  #allocation1 [shape = 'u32[144,128]{1,0:T(1,128)}', space=vmem, size = 0x12000, scoped, tag = 'internal scratch']
  #allocation2 [shape = 'f32[1,8,128]{2,1,0:T(8,128)}', space=vmem, size = 0x1000, scoped, tag = 'scratch operand']
  #allocation3 [shape = 's32[8]{0}', space=sflag, size = 0x20, scoped, tag = 'scratch operand']
  #allocation4 [shape = 's32[1]{0}', space=sflag, size = 0x4, scoped, tag = 'scoped memory for tpu_custom_call.1']
  #allocation5 [shape = 'u8[512]{0}', space=smem, size = 0x200, scoped, tag = 'prefetched SMEM operand 0']
  #allocation12 [shape = 's32[]', space=sflag, size = 0x4, offset = 0, fixed_abs, tag = 'sflag constant byte address 0x0 - dummy sync flag']
  #allocation13 [shape = 's32[]', space=sflag, size = 0x4, offset = 0, fixed_abs, tag = 'sflag constant byte address 0x0 - dummy sync flag']
  #allocation14 [shape = 'u32[]', space=smem, size = 0x4, offset = 0x44, fixed_abs, tag = 'smem constant byte address 0x44 - assertion arg 0']
  #allocation15 [shape = 'u32[]', space=smem, size = 0x4, offset = 0x48, fixed_abs, tag = 'smem constant byte address 0x48 - assertion arg 1']
  %s0 = inlined_call_operand.hbm [shape: s32[8], index: 0, kind: input, shape index: {}]
  %s1 = inlined_call_operand.hbm [shape: f32[16,128], index: 1, kind: input, shape index: {}]
  %s2 = inlined_call_operand.hbm [shape: f32[128,128], index: 2, kind: input, shape index: {}]
  %s3 = inlined_call_operand.vmem [shape: f32[1,128], index: 3, kind: input, shape index: {}]
  %s4 = inlined_call_operand.hbm [shape: f32[128,128], index: 4, kind: input, shape index: {}]
  %s5 = inlined_call_operand.vmem [shape: f32[1,128], index: 5, kind: input, shape index: {}]
  %s6 = inlined_call_operand.hbm [shape: f32[8,128], index: 6, kind: output, shape index: {}]
  %s7 = sld [smem:[#allocation0]]
  $region52: #{tpu_custom_call.1} parent=0
    _
  %s9 = ssub.s32 1, %s7
  %s10 = scalar_select 0, %s9, %s7
  %12 = dma.hbm_to_smem %s0, 16, [#allocation5], [#allocation4]
  %13 = dma.done [#allocation4], 16
  %14 = sfence
  $region1: #{tpu_custom_call.1} parent=0
    #allocation6 [shape = 'u8[65536]{0}', space=vmem, size = 0x10000, scoped, tag = 'input window, operand 2, single buffered']
    #allocation7 [shape = 's32[1]{0}', space=sflag, size = 0x4, scoped, tag = 'scoped memory for tpu_custom_call.1']
    #allocation8 [shape = 's32[1]{0}', space=sflag, size = 0x4, scoped, tag = 'scoped memory for tpu_custom_call.1']
    #allocation9 [shape = 'u8[65536]{0}', space=vmem, size = 0x10000, scoped, tag = 'input window, operand 4, single buffered']
    #allocation10 [shape = 's32[1]{0}', space=sflag, size = 0x4, scoped, tag = 'scoped memory for tpu_custom_call.1']
    #allocation11 [shape = 'u8[4096]{0}', space=vmem, size = 0x1000, scoped, tag = 'output window, operand 0, single buffered']
    %15 = vsyncpa [#allocation7], 0
    %16 = vsyncpa [#allocation10], 0
    %17 = vsyncpa [#allocation8], 0
    // Predicated region
    $region2: #{tpu_custom_call.1} parent=1 // pred_check
      _
    $region3: #{tpu_custom_call.1} parent=1 // pred_check_branch
      %19 = sbr.rel (0) target = $region5
    $region4: #{tpu_custom_call.1} parent=1 // pred_region
      %s21 = ssub.s32 2048, 2048
      %22 = vsyncadd [#allocation7], %s21
      %s23 = sshll.u32 [#allocation6], 4
      %s24 = int_to_ptr.vmem [resolvable:$true] %s23
      %29 = dma.hbm_to_vmem [thread:$0]  %s2, 2048, %s24, [#allocation7], 128, 128, 8
    $region5: #{tpu_custom_call.1} parent=1 // pred_fallthru
      _
    // Predicated region
    $region6: #{tpu_custom_call.1} parent=1 // pred_check
      _
    $region7: #{tpu_custom_call.1} parent=1 // pred_check_branch
      %31 = sbr.rel (0) target = $region9
    $region8: #{tpu_custom_call.1} parent=1 // pred_region
      _
    $region9: #{tpu_custom_call.1} parent=1 // pred_fallthru
      _
    // Predicated region
    $region10: #{tpu_custom_call.1} parent=1 // pred_check
      _
    $region11: #{tpu_custom_call.1} parent=1 // pred_check_branch
      %33 = sbr.rel (0) target = $region13
    $region12: #{tpu_custom_call.1} parent=1 // pred_region
      %s35 = ssub.s32 2048, 2048
      %36 = vsyncadd [#allocation10], %s35
      %s37 = sshll.u32 [#allocation9], 4
      %s38 = int_to_ptr.vmem [resolvable:$true] %s37
      %43 = dma.hbm_to_vmem [thread:$0]  %s4, 2048, %s38, [#allocation10], 128, 128, 8
    $region13: #{tpu_custom_call.1} parent=1 // pred_fallthru
      _
    // Predicated region
    $region14: #{tpu_custom_call.1} parent=1 // pred_check
      _
    $region15: #{tpu_custom_call.1} parent=1 // pred_check_branch
      %45 = sbr.rel (0) target = $region17
    $region16: #{tpu_custom_call.1} parent=1 // pred_region
      _
    $region17: #{tpu_custom_call.1} parent=1 // pred_fallthru
      _
    // Predicated region
    $region18: #{tpu_custom_call.1} parent=1 // pred_check
      _
    $region19: #{tpu_custom_call.1} parent=1 // pred_check_branch
      %47 = sbr.rel (0) target = $region21
    $region20: #{tpu_custom_call.1} parent=1 // pred_region
      %48 = dma.done [#allocation7], 2048
    $region21: #{tpu_custom_call.1} parent=1 // pred_fallthru
      _
    // Predicated region
    $region22: #{tpu_custom_call.1} parent=1 // pred_check
      _
    $region23: #{tpu_custom_call.1} parent=1 // pred_check_branch
      %50 = sbr.rel (0) target = $region25
    $region24: #{tpu_custom_call.1} parent=1 // pred_region
      %51 = dma.done [#allocation10], 2048
    $region25: #{tpu_custom_call.1} parent=1 // pred_fallthru
      _
    loop: start=0, step=1, limit=8
    $region26: #{tpu_custom_call.1} parent=1 // loop_pre_header
      _
    $region27: #{tpu_custom_call.1} parent=1 // loop_header
      %s53 = sphi 0, %s57
      %p54 = scmp.ge.s32.totalorder %s53, 8
    $region28: #{tpu_custom_call.1} parent=1 // loop_header_branch
      %56 = sbr.rel (%p54) target = $region32
    $region29: #{tpu_custom_call.1} parent=1 // loop_body
      %s58 = sld [smem:[#allocation5 + %s53]]
      %s59 = smul.addr %s58, 16
      %s60 = scalar_lea.hbm %s1, %s59
      %s61 = scalar_lea.vmem [#allocation2], %s53
      %s62 = scalar_lea.sflag [#allocation3], %s53
      // Predicated region
      $region33: #{tpu_custom_call.1} parent=29 // pred_check
        _
      $region34: #{tpu_custom_call.1} parent=29 // pred_check_branch
        %64 = sbr.rel target = $region36
      $region35: #{tpu_custom_call.1} parent=29 // pred_region
        %65 = sst [smem:[#allocation14]] [#allocation13]
        %66 = sst [smem:[#allocation15]] [#allocation12]
      $region36: #{tpu_custom_call.1} parent=29 // pred_fallthru
        _
      %68 = shalt.err (0)
      %s70 = sshll.u32 %s61, 4
      %s71 = int_to_ptr.vmem [resolvable:$true] %s70
      %73 = dma.hbm_to_vmem [thread:$0]  %s60, 16, %s71, %s62
    $region30: #{tpu_custom_call.1} parent=1 // loop_footer
      %s57 = sadd.s32 1, %s53
    $region31: #{tpu_custom_call.1} parent=1 // loop_footer_branch
      %52 = sbr.rel target = $region27
    $region32: #{tpu_custom_call.1} parent=1 // loop_exit
      _
    %s74 = smul.u32 0, 8
    loop: start=0, step=1, limit=8
    $region37: #{tpu_custom_call.1} parent=1 // loop_pre_header
      _
    $region38: #{tpu_custom_call.1} parent=1 // loop_header
      %s76 = sphi 0, %s80
      %p77 = scmp.ge.s32.totalorder %s76, 8
    $region39: #{tpu_custom_call.1} parent=1 // loop_header_branch
      %79 = sbr.rel (%p77) target = $region43
    $region40: #{tpu_custom_call.1} parent=1 // loop_body
      %s81 = sadd.s32 %s74, %s76
      %s82 = sld [smem:[#allocation5 + %s81]]
      %s83 = scalar_lea.sflag [#allocation3], %s76
      %s84 = smul.u32 1, 1
      %s85 = sshll.u32 %s84, 4
      %86 = dma.done %s83, %s85
    $region41: #{tpu_custom_call.1} parent=1 // loop_footer
      %s80 = sadd.s32 1, %s76
    $region42: #{tpu_custom_call.1} parent=1 // loop_footer_branch
      %75 = sbr.rel target = $region38
    $region43: #{tpu_custom_call.1} parent=1 // loop_exit
      _
    %v87 = vld [vmem:[#allocation2] sm:$0xff]
    %v88 = vld [vmem:[#allocation6] sm:$0xff]
    %v89 = vld [vmem:[#allocation6 + $0x8] sm:$0xff]
    %v90 = vld [vmem:[#allocation6 + $0x10] sm:$0xff]
    %v91 = vld [vmem:[#allocation6 + $0x18] sm:$0xff]
    %v92 = vld [vmem:[#allocation6 + $0x20] sm:$0xff]
    %v93 = vld [vmem:[#allocation6 + $0x28] sm:$0xff]
    %v94 = vld [vmem:[#allocation6 + $0x30] sm:$0xff]
    %v95 = vld [vmem:[#allocation6 + $0x38] sm:$0xff]
    %v96 = vld [vmem:[#allocation6 + $0x40] sm:$0xff]
    %v97 = vld [vmem:[#allocation6 + $0x48] sm:$0xff]
    %v98 = vld [vmem:[#allocation6 + $0x50] sm:$0xff]
    %v99 = vld [vmem:[#allocation6 + $0x58] sm:$0xff]
    %v100 = vld [vmem:[#allocation6 + $0x60] sm:$0xff]
    %v101 = vld [vmem:[#allocation6 + $0x68] sm:$0xff]
    %v102 = vld [vmem:[#allocation6 + $0x70] sm:$0xff]
    %v103 = vld [vmem:[#allocation6 + $0x78] sm:$0xff]
    %v104 = vld [vmem:[#allocation9] sm:$0xff]
    %v105 = vld [vmem:[#allocation9 + $0x8] sm:$0xff]
    %v106 = vld [vmem:[#allocation9 + $0x10] sm:$0xff]
    %v107 = vld [vmem:[#allocation9 + $0x18] sm:$0xff]
    %v108 = vld [vmem:[#allocation9 + $0x20] sm:$0xff]
    %v109 = vld [vmem:[#allocation9 + $0x28] sm:$0xff]
    %v110 = vld [vmem:[#allocation9 + $0x30] sm:$0xff]
    %v111 = vld [vmem:[#allocation9 + $0x38] sm:$0xff]
    %v112 = vld [vmem:[#allocation9 + $0x40] sm:$0xff]
    %v113 = vld [vmem:[#allocation9 + $0x48] sm:$0xff]
    %v114 = vld [vmem:[#allocation9 + $0x50] sm:$0xff]
    %v115 = vld [vmem:[#allocation9 + $0x58] sm:$0xff]
    %v116 = vld [vmem:[#allocation9 + $0x60] sm:$0xff]
    %v117 = vld [vmem:[#allocation9 + $0x68] sm:$0xff]
    %v118 = vld [vmem:[#allocation9 + $0x70] sm:$0xff]
    %v119 = vld [vmem:[#allocation9 + $0x78] sm:$0xff]
    %v120 = vld [vmem:[%s3] sm:$0x1]
    %v122 = vlaneseq
    %v123 = vshrl.u32 %v122, 7
    %v124 = vsub.s32 0, %v123
    %v125 = vrot.slane %v120, %v124
    %127 = vmatprep.subr.mxu0 0.0
    %128 = vmatpush1.msra.mxu0 %v88
    %129 = vmatprep.subr.mxu0 0.0
    %130 = vmatpush1.msra.mxu0 %v89
    %131 = vmatprep.subr.mxu0 0.0
    %132 = vmatpush1.msra.mxu0 %v90
    %133 = vmatprep.subr.mxu0 0.0
    %134 = vmatpush1.msra.mxu0 %v91
    %135 = vmatprep.subr.mxu0 0.0
    %136 = vmatpush1.msra.mxu0 %v92
    %137 = vmatprep.subr.mxu0 0.0
    %138 = vmatpush1.msra.mxu0 %v93
    %139 = vmatprep.subr.mxu0 0.0
    %140 = vmatpush1.msra.mxu0 %v94
    %141 = vmatprep.subr.mxu0 0.0
    %142 = vmatpush1.msra.mxu0 %v95
    %143 = vmatprep.subr.mxu0 0.0
    %144 = vmatpush1.msra.mxu0 %v96
    %145 = vmatprep.subr.mxu0 0.0
    %146 = vmatpush1.msra.mxu0 %v97
    %147 = vmatprep.subr.mxu0 0.0
    %148 = vmatpush1.msra.mxu0 %v98
    %149 = vmatprep.subr.mxu0 0.0
    %150 = vmatpush1.msra.mxu0 %v99
    %151 = vmatprep.subr.mxu0 0.0
    %152 = vmatpush1.msra.mxu0 %v100
    %153 = vmatprep.subr.mxu0 0.0
    %154 = vmatpush1.msra.mxu0 %v101
    %155 = vmatprep.subr.mxu0 0.0
    %156 = vmatpush1.msra.mxu0 %v102
    %157 = vmatprep.subr.mxu0 0.0
    %158 = vmatpush1.msra.mxu0 %v103
    %159 = vmatprep.subr.mxu0 0.0
    %160 = vmatpush1.msra.mxu0 0.0
    %161 = vmatprep.subr.mxu0 0.0
    %162 = vmatpush1.msra.mxu0 0.0
    %163 = vmatprep.subr.mxu0 0.0
    %164 = vmatpush1.msra.mxu0 0.0
    %165 = vmatprep.subr.mxu0 0.0
    %166 = vmatpush1.msra.mxu0 0.0
    %167 = vmatprep.subr.mxu0 0.0
    %168 = vmatpush1.msra.mxu0 0.0
    %169 = vmatprep.subr.mxu0 0.0
    %170 = vmatpush1.msra.mxu0 0.0
    %171 = vmatprep.subr.mxu0 0.0
    %172 = vmatpush1.msra.mxu0 0.0
    %173 = vmatprep.subr.mxu0 0.0
    %174 = vmatpush1.msra.mxu0 0.0
    %175 = vmatprep.subr.mxu0 0.0
    %176 = vmatpush1.msra.mxu0 0.0
    %177 = vmatprep.subr.mxu0 0.0
    %178 = vmatpush1.msra.mxu0 0.0
    %179 = vmatprep.subr.mxu0 0.0
    %180 = vmatpush1.msra.mxu0 0.0
    %181 = vmatprep.subr.mxu0 0.0
    %182 = vmatpush1.msra.mxu0 0.0
    %183 = vmatprep.subr.mxu0 0.0
    %184 = vmatpush1.msra.mxu0 0.0
    %185 = vmatprep.subr.mxu0 0.0
    %186 = vmatpush1.msra.mxu0 0.0
    %187 = vmatprep.subr.mxu0 0.0
    %188 = vmatpush1.msra.mxu0 0.0
    %189 = vmatprep.subr.mxu0 0.0
    %190 = vmatpush1.msra.mxu0 0.0
    %191 = vmatprep.mubr.f32.mxu0 0.0
    %192 = vmatmul.mubr.f32.gmra.mrb[0].mxu0 %v87
    %v193 = vpop.f32.mrb[0].mxu0
    %v194 = vadd.f32 %v125, %v193
    %v195 = vpop.f32.mrb[0].mxu0
    %196 = vdwg.mxu0
    %v197 = vmax.f32 %v194, 0.0
    %v198 = vld [vmem:[%s5] sm:$0x1]
    %v200 = vlaneseq
    %v201 = vshrl.u32 %v200, 7
    %v202 = vsub.s32 0, %v201
    %v203 = vrot.slane %v198, %v202
    %205 = vmatprep.subr.mxu0 0.0
    %206 = vmatpush1.msra.mxu0 %v104
    %207 = vmatprep.subr.mxu0 0.0
    %208 = vmatpush1.msra.mxu0 %v105
    %209 = vmatprep.subr.mxu0 0.0
    %210 = vmatpush1.msra.mxu0 %v106
    %211 = vmatprep.subr.mxu0 0.0
    %212 = vmatpush1.msra.mxu0 %v107
    %213 = vmatprep.subr.mxu0 0.0
    %214 = vmatpush1.msra.mxu0 %v108
    %215 = vmatprep.subr.mxu0 0.0
    %216 = vmatpush1.msra.mxu0 %v109
    %217 = vmatprep.subr.mxu0 0.0
    %218 = vmatpush1.msra.mxu0 %v110
    %219 = vmatprep.subr.mxu0 0.0
    %220 = vmatpush1.msra.mxu0 %v111
    %221 = vmatprep.subr.mxu0 0.0
    %222 = vmatpush1.msra.mxu0 %v112
    %223 = vmatprep.subr.mxu0 0.0
    %224 = vmatpush1.msra.mxu0 %v113
    %225 = vmatprep.subr.mxu0 0.0
    %226 = vmatpush1.msra.mxu0 %v114
    %227 = vmatprep.subr.mxu0 0.0
    %228 = vmatpush1.msra.mxu0 %v115
    %229 = vmatprep.subr.mxu0 0.0
    %230 = vmatpush1.msra.mxu0 %v116
    %231 = vmatprep.subr.mxu0 0.0
    %232 = vmatpush1.msra.mxu0 %v117
    %233 = vmatprep.subr.mxu0 0.0
    %234 = vmatpush1.msra.mxu0 %v118
    %235 = vmatprep.subr.mxu0 0.0
    %236 = vmatpush1.msra.mxu0 %v119
    %237 = vmatprep.subr.mxu0 0.0
    %238 = vmatpush1.msra.mxu0 0.0
    %239 = vmatprep.subr.mxu0 0.0
    %240 = vmatpush1.msra.mxu0 0.0
    %241 = vmatprep.subr.mxu0 0.0
    %242 = vmatpush1.msra.mxu0 0.0
    %243 = vmatprep.subr.mxu0 0.0
    %244 = vmatpush1.msra.mxu0 0.0
    %245 = vmatprep.subr.mxu0 0.0
    %246 = vmatpush1.msra.mxu0 0.0
    %247 = vmatprep.subr.mxu0 0.0
    %248 = vmatpush1.msra.mxu0 0.0
    %249 = vmatprep.subr.mxu0 0.0
    %250 = vmatpush1.msra.mxu0 0.0
    %251 = vmatprep.subr.mxu0 0.0
    %252 = vmatpush1.msra.mxu0 0.0
    %253 = vmatprep.subr.mxu0 0.0
    %254 = vmatpush1.msra.mxu0 0.0
    %255 = vmatprep.subr.mxu0 0.0
    %256 = vmatpush1.msra.mxu0 0.0
    %257 = vmatprep.subr.mxu0 0.0
    %258 = vmatpush1.msra.mxu0 0.0
    %259 = vmatprep.subr.mxu0 0.0
    %260 = vmatpush1.msra.mxu0 0.0
    %261 = vmatprep.subr.mxu0 0.0
    %262 = vmatpush1.msra.mxu0 0.0
    %263 = vmatprep.subr.mxu0 0.0
    %264 = vmatpush1.msra.mxu0 0.0
    %265 = vmatprep.subr.mxu0 0.0
    %266 = vmatpush1.msra.mxu0 0.0
    %267 = vmatprep.subr.mxu0 0.0
    %268 = vmatpush1.msra.mxu0 0.0
    %269 = vmatprep.mubr.f32.mxu0 0.0
    %270 = vmatmul.mubr.f32.gmra.mrb[0].mxu0 %v197
    %v271 = vpop.f32.mrb[0].mxu0
    %v272 = vadd.f32 %v203, %v271
    %v273 = vpop.f32.mrb[0].mxu0
    %274 = vdwg.mxu0
    %275 = vst [vmem:[#allocation11] sm:$0xff] %v272
    // Predicated region
    $region44: #{tpu_custom_call.1} parent=1 // pred_check
      _
    $region45: #{tpu_custom_call.1} parent=1 // pred_check_branch
      %277 = sbr.rel (0) target = $region47
    $region46: #{tpu_custom_call.1} parent=1 // pred_region
      %s279 = ssub.s32 128, 128
      %280 = vsyncadd [#allocation8], %s279
      %s282 = sshll.u32 [#allocation11], 4
      %s283 = int_to_ptr.vmem [resolvable:$true] %s282
      %285 = dma.vmem_to_hbm [thread:$0]  %s283, 128, %s6, [#allocation8]
    $region47: #{tpu_custom_call.1} parent=1 // pred_fallthru
      _
    // Predicated region
    $region48: #{tpu_custom_call.1} parent=1 // pred_check
      _
    $region49: #{tpu_custom_call.1} parent=1 // pred_check_branch
      %287 = sbr.rel (0) target = $region51
    $region50: #{tpu_custom_call.1} parent=1 // pred_region
      %288 = dma.done [#allocation8], 128
    $region51: #{tpu_custom_call.1} parent=1 // pred_fallthru
      _
    %289 = vsyncpa [#allocation7], 1
    %290 = vsyncpa [#allocation10], 1
    %291 = vsyncpa [#allocation8], 1
  %292 = vsyncmov [#allocation3]
  %s293 = vpop.sfrf %292
  %p294 = scmp.eq.s32.totalorder %s293, 0
  %p295 = pneg %p294
  %297 = shalt.err (%p295)
  %s298 = scalar_lea.sflag [#allocation3], 1
  %299 = vsyncmov %s298
  %s300 = vpop.sfrf %299
  %p301 = scmp.eq.s32.totalorder %s300, 0
  %p302 = pneg %p301
  %304 = shalt.err (%p302)
  %s305 = scalar_lea.sflag [#allocation3], 2
  %306 = vsyncmov %s305
  %s307 = vpop.sfrf %306
  %p308 = scmp.eq.s32.totalorder %s307, 0
  %p309 = pneg %p308
  %311 = shalt.err (%p309)
  %s312 = scalar_lea.sflag [#allocation3], 3
  %313 = vsyncmov %s312
  %s314 = vpop.sfrf %313
  %p315 = scmp.eq.s32.totalorder %s314, 0
  %p316 = pneg %p315
  %318 = shalt.err (%p316)
  %s319 = scalar_lea.sflag [#allocation3], 4
  %320 = vsyncmov %s319
  %s321 = vpop.sfrf %320
  %p322 = scmp.eq.s32.totalorder %s321, 0
  %p323 = pneg %p322
  %325 = shalt.err (%p323)
  %s326 = scalar_lea.sflag [#allocation3], 5
  %327 = vsyncmov %s326
  %s328 = vpop.sfrf %327
  %p329 = scmp.eq.s32.totalorder %s328, 0
  %p330 = pneg %p329
  %332 = shalt.err (%p330)
  %s333 = scalar_lea.sflag [#allocation3], 6
  %334 = vsyncmov %s333
  %s335 = vpop.sfrf %334
  %p336 = scmp.eq.s32.totalorder %s335, 0
  %p337 = pneg %p336
  %339 = shalt.err (%p337)
  %s340 = scalar_lea.sflag [#allocation3], 7
  %341 = vsyncmov %s340
  %s342 = vpop.sfrf %341
  %p343 = scmp.eq.s32.totalorder %s342, 0
  %p344 = pneg %p343
  %346 = shalt.err (%p344)

</llo_original>
